<compile_context>
chip_gen: v5e
topology: v5e:2x2
jax: 0.10.0
libtpu: 0.0.40
codegen_flags: <defaults>
</compile_context>

<pallas_src>
import jax
import jax.numpy as jnp
from jax.experimental import pallas as pl
from jax.experimental.pallas import tpu as pltpu


def _stacked_attention_kernel(img_ref, q_ref,
                              w_img_ref, b_img_ref,
                              w_q_ref, b_q_ref,
                              w_att_ref, b_att_ref,
                              u_ref):
    B, _C = q_ref.shape
    BN = img_ref.shape[0]
    N = BN // B

    img2d = img_ref[...]                                   # (B*N, C)
    q = q_ref[...]                                         # (B, C)

    # ff_image over all batch*spatial rows at once: one MXU matmul, M = B*N.
    key = jnp.dot(img2d, w_img_ref[...],
                  preferred_element_type=jnp.float32) + b_img_ref[...]      # (B*N, K)
    # ff_ques
    query = jnp.dot(q, w_q_ref[...],
                    preferred_element_type=jnp.float32) + b_q_ref[...]      # (B, K)

    w_att_row = w_att_ref[...]                             # (1, K)
    b_att = b_att_ref[...]                                 # (1, 1)

    # Small, static batch: unroll the per-sample epilogue at trace time.
    # (All slices below are static; no reshapes / transposes inside the kernel.)
    u_rows = []
    for b in range(B):
        key_b = key[b * N:(b + 1) * N, :]                  # (N, K)
        img_b = img2d[b * N:(b + 1) * N, :]                # (N, C)
        z_b = jnp.tanh(key_b + query[b:b + 1, :])          # (N, K)

        # ff_attention as (1,K) . (N,K)^T on the MXU -> lane-dense (1, N) logits.
        logits = jnp.einsum('ok,nk->on', w_att_row, z_b,
                            preferred_element_type=jnp.float32) + b_att     # (1, N)

        # softmax over the spatial axis (torch dim=-2), here the lane axis.
        m = jnp.max(logits, axis=-1, keepdims=True)
        e = jnp.exp(logits - m)
        denom = jnp.sum(e, axis=-1, keepdims=True)
        prob = e * pl.reciprocal(denom, approx=True)       # (1, N)

        # attention-weighted sum of image vectors: MXU matvec.
        vi = jnp.dot(prob, img_b, preferred_element_type=jnp.float32)       # (1, C)
        u_rows.append(vi + q[b:b + 1, :])

    u_ref[...] = jnp.concatenate(u_rows, axis=0)           # (B, C)


def attention_layer(encoded_image, encoded_question, params):
    """One AttentionLayer forward. Returns u of shape [B, C]."""
    B, N, C = encoded_image.shape
    # Free, contiguous view: lets ff_image run as one (B*N, C) @ (C, K) matmul.
    img2d = encoded_image.reshape(B * N, C)

    vmem = pl.BlockSpec(memory_space=pltpu.MemorySpace.VMEM)
    u = pl.pallas_call(
        _stacked_attention_kernel,
        out_shape=jax.ShapeDtypeStruct((B, C), jnp.float32),
        in_specs=[vmem] * 8,
        out_specs=vmem,
        # At these sizes everything fits trivially in VMEM on a single TensorCore.
        # TODO(synk): for production SAN shapes (large B / C / K), tile the batch
        # with a grid + dimension_semantics=("parallel",), use bf16 MXU operands
        # (f32 epilogue), and budget tiles for v7x's 64 MiB VMEM.
    )(img2d, encoded_question,
      params["w_img"], params["b_img"],
      params["w_q"], params["b_q"],
      params["w_att"], params["b_att"])
    return u


def stacked_attention_layer(encoded_image, encoded_question, params,
                            num_att_layers=2):
    """StackedAttentionLayer.forward.

    The PyTorch module builds `nn.ModuleList([AttentionLayer(...)] * num_att_layers)`:
    every entry is the SAME layer object (shared weights) and each is applied to the
    original (encoded_image, encoded_question); only the last u is returned.  One
    application is therefore mathematically identical to num_att_layers applications,
    so we launch the kernel exactly once.
    """
    del num_att_layers  # iterations are identical; see docstring.
    # attention_prob is only consumed by the host-side visualization path
    # (AppState().visualize), which has no Pallas equivalent — it is not computed
    # back to HBM here.
    return attention_layer(encoded_image, encoded_question, params)


def init_params(key, question_image_encoding_size, key_query_size):
    C, K = question_image_encoding_size, key_query_size
    ks = jax.random.split(key, 6)
    scale = 0.1
    return {
        # ff_image / ff_ques weights stored pre-transposed: (in_features, out_features)
        "w_img": (scale * jax.random.normal(ks[0], (C, K))).astype(jnp.float32),
        "b_img": (scale * jax.random.normal(ks[1], (1, K))).astype(jnp.float32),
        "w_q":   (scale * jax.random.normal(ks[2], (C, K))).astype(jnp.float32),
        "b_q":   (scale * jax.random.normal(ks[3], (1, K))).astype(jnp.float32),
        # ff_attention weight kept in torch-native (out=1, in=K) row layout
        "w_att": (scale * jax.random.normal(ks[4], (1, K))).astype(jnp.float32),
        "b_att": (scale * jax.random.normal(ks[5], (1, 1))).astype(jnp.float32),
    }


def _reference(encoded_image, encoded_question, params):
    """Plain-JAX reference of one AttentionLayer (== the stacked module output)."""
    key = encoded_image @ params["w_img"] + params["b_img"]                 # (B,N,K)
    query = (encoded_question @ params["w_q"] + params["b_q"])[:, None, :]  # (B,1,K)
    z = jnp.tanh(key + query)
    logits = z @ params["w_att"].T + params["b_att"]                        # (B,N,1)
    prob = jax.nn.softmax(logits, axis=-2)
    vi = jnp.sum(prob * encoded_image, axis=1)
    return vi + encoded_question


if __name__ == "__main__":
    # Small shapes consistent with the module:
    #   question_image_encoding_size C = 32, key_query_size K = 64,
    #   spatial N = W*H = 64 (8x8 feature map), batch B = 2.
    B, N, C, K = 2, 64, 32, 64

    root = jax.random.PRNGKey(0)
    k_img, k_q, k_p = jax.random.split(root, 3)
    encoded_image = jax.random.normal(k_img, (B, N, C), dtype=jnp.float32)
    encoded_question = jax.random.normal(k_q, (B, C), dtype=jnp.float32)
    params = init_params(k_p, C, K)

    u = stacked_attention_layer(encoded_image, encoded_question, params,
                                num_att_layers=2)
    u = jax.block_until_ready(u)

    # Correctness check vs. plain-JAX reference. Tolerance is slightly loose
    # because the kernel uses the EUP approximate reciprocal for the softmax
    # normalization (pl.reciprocal(..., approx=True)).
    u_ref = _reference(encoded_image, encoded_question, params)
    assert u.shape == (B, C)
    assert jnp.allclose(u, u_ref, atol=5e-3, rtol=5e-3), "mismatch vs reference"

    print("KERNEL_OK")
</pallas_src>

<mosaic_0001>
module attributes {stable_mosaic.version = 11 : i64} {
  func.func @_stacked_attention_kernel(%arg0: memref<128x32xf32, #tpu.memory_space<vmem>>, %arg1: memref<2x32xf32, #tpu.memory_space<vmem>>, %arg2: memref<32x64xf32, #tpu.memory_space<vmem>>, %arg3: memref<1x64xf32, #tpu.memory_space<vmem>>, %arg4: memref<32x64xf32, #tpu.memory_space<vmem>>, %arg5: memref<1x64xf32, #tpu.memory_space<vmem>>, %arg6: memref<1x64xf32, #tpu.memory_space<vmem>>, %arg7: memref<1x1xf32, #tpu.memory_space<vmem>>, %arg8: memref<2x32xf32, #tpu.memory_space<vmem>>) attributes {dimension_semantics = [], scalar_prefetch = 0 : i64, scratch_operands = 0 : i64, tpu.core_type = #tpu.core_type<tc>} {
    %c0 = arith.constant 0 : index
    %c0_0 = arith.constant 0 : index
    %0 = vector.load %arg0[%c0, %c0_0] : memref<128x32xf32, #tpu.memory_space<vmem>>, vector<128x32xf32>
    %c0_1 = arith.constant 0 : index
    %c0_2 = arith.constant 0 : index
    %1 = vector.load %arg1[%c0_1, %c0_2] : memref<2x32xf32, #tpu.memory_space<vmem>>, vector<2x32xf32>
    %c0_3 = arith.constant 0 : index
    %c0_4 = arith.constant 0 : index
    %2 = vector.load %arg2[%c0_3, %c0_4] : memref<32x64xf32, #tpu.memory_space<vmem>>, vector<32x64xf32>
    %cst = arith.constant dense<0.000000e+00> : vector<128x64xf32>
    %3 = tpu.matmul %0, %2, %cst {dimension_numbers = #tpu.dot_dimension_numbers<[1], [0], [0], [1], [0, 0, 1, 1], [], []>} : vector<128x32xf32>, vector<32x64xf32>, vector<128x64xf32> -> vector<128x64xf32>
    %c0_5 = arith.constant 0 : index
    %c0_6 = arith.constant 0 : index
    %4 = vector.load %arg3[%c0_5, %c0_6] : memref<1x64xf32, #tpu.memory_space<vmem>>, vector<1x64xf32>
    %5 = vector.broadcast %4 : vector<1x64xf32> to vector<128x64xf32>
    %6 = arith.addf %3, %5 : vector<128x64xf32>
    %c0_7 = arith.constant 0 : index
    %c0_8 = arith.constant 0 : index
    %7 = vector.load %arg4[%c0_7, %c0_8] : memref<32x64xf32, #tpu.memory_space<vmem>>, vector<32x64xf32>
    %cst_9 = arith.constant dense<0.000000e+00> : vector<2x64xf32>
    %8 = tpu.matmul %1, %7, %cst_9 {dimension_numbers = #tpu.dot_dimension_numbers<[1], [0], [0], [1], [0, 0, 1, 1], [], []>} : vector<2x32xf32>, vector<32x64xf32>, vector<2x64xf32> -> vector<2x64xf32>
    %c0_10 = arith.constant 0 : index
    %c0_11 = arith.constant 0 : index
    %9 = vector.load %arg5[%c0_10, %c0_11] : memref<1x64xf32, #tpu.memory_space<vmem>>, vector<1x64xf32>
    %10 = vector.broadcast %9 : vector<1x64xf32> to vector<2x64xf32>
    %11 = arith.addf %8, %10 : vector<2x64xf32>
    %c0_12 = arith.constant 0 : index
    %c0_13 = arith.constant 0 : index
    %12 = vector.load %arg6[%c0_12, %c0_13] : memref<1x64xf32, #tpu.memory_space<vmem>>, vector<1x64xf32>
    %c0_14 = arith.constant 0 : index
    %c0_15 = arith.constant 0 : index
    %13 = vector.load %arg7[%c0_14, %c0_15] : memref<1x1xf32, #tpu.memory_space<vmem>>, vector<1x1xf32>
    %14 = vector.extract_strided_slice %6 {offsets = [0, 0], sizes = [64, 64], strides = [1, 1]} : vector<128x64xf32> to vector<64x64xf32>
    %15 = vector.extract_strided_slice %0 {offsets = [0, 0], sizes = [64, 32], strides = [1, 1]} : vector<128x32xf32> to vector<64x32xf32>
    %16 = vector.extract_strided_slice %11 {offsets = [0, 0], sizes = [1, 64], strides = [1, 1]} : vector<2x64xf32> to vector<1x64xf32>
    %17 = vector.broadcast %16 : vector<1x64xf32> to vector<64x64xf32>
    %18 = arith.addf %14, %17 : vector<64x64xf32>
    %19 = math.tanh %18 : vector<64x64xf32>
    "tpu.trace_start"() <{level = 10 : i32, message = "ok,nk->on"}> : () -> ()
    %cst_16 = arith.constant dense<0.000000e+00> : vector<1x64xf32>
    %20 = tpu.matmul %12, %19, %cst_16 {dimension_numbers = #tpu.dot_dimension_numbers<[1], [1], [0], [0], [0, 0, 1, 0], [], []>} : vector<1x64xf32>, vector<64x64xf32>, vector<1x64xf32> -> vector<1x64xf32>
    "tpu.trace_stop"() : () -> ()
    %21 = vector.broadcast %13 : vector<1x1xf32> to vector<1x64xf32>
    %22 = arith.addf %20, %21 : vector<1x64xf32>
    %cst_17 = arith.constant dense<0xFF800000> : vector<1xf32>
    %23 = vector.multi_reduction <maximumf>, %22, %cst_17 [1] : vector<1x64xf32> to vector<1xf32>
    %24 = vector.shape_cast %23 : vector<1xf32> to vector<1x1xf32>
    %25 = vector.broadcast %24 : vector<1x1xf32> to vector<1x64xf32>
    %26 = arith.subf %22, %25 : vector<1x64xf32>
    %27 = math.exp %26 : vector<1x64xf32>
    %cst_18 = arith.constant dense<0.000000e+00> : vector<1xf32>
    %28 = vector.multi_reduction <add>, %27, %cst_18 [1] : vector<1x64xf32> to vector<1xf32>
    %29 = vector.shape_cast %28 : vector<1xf32> to vector<1x1xf32>
    %30 = tpu.reciprocal %29 {approx = true} : vector<1x1xf32> -> vector<1x1xf32>
    %31 = vector.broadcast %30 : vector<1x1xf32> to vector<1x64xf32>
    %32 = arith.mulf %27, %31 : vector<1x64xf32>
    %cst_19 = arith.constant dense<0.000000e+00> : vector<1x32xf32>
    %33 = tpu.matmul %32, %15, %cst_19 {dimension_numbers = #tpu.dot_dimension_numbers<[1], [0], [0], [1], [0, 0, 1, 1], [], []>} : vector<1x64xf32>, vector<64x32xf32>, vector<1x32xf32> -> vector<1x32xf32>
    %34 = vector.extract_strided_slice %1 {offsets = [0, 0], sizes = [1, 32], strides = [1, 1]} : vector<2x32xf32> to vector<1x32xf32>
    %35 = arith.addf %33, %34 : vector<1x32xf32>
    %36 = vector.extract_strided_slice %6 {offsets = [64, 0], sizes = [64, 64], strides = [1, 1]} : vector<128x64xf32> to vector<64x64xf32>
    %37 = vector.extract_strided_slice %0 {offsets = [64, 0], sizes = [64, 32], strides = [1, 1]} : vector<128x32xf32> to vector<64x32xf32>
    %38 = vector.extract_strided_slice %11 {offsets = [1, 0], sizes = [1, 64], strides = [1, 1]} : vector<2x64xf32> to vector<1x64xf32>
    %39 = vector.broadcast %38 : vector<1x64xf32> to vector<64x64xf32>
    %40 = arith.addf %36, %39 : vector<64x64xf32>
    %41 = math.tanh %40 : vector<64x64xf32>
    "tpu.trace_start"() <{level = 10 : i32, message = "ok,nk->on"}> : () -> ()
    %cst_20 = arith.constant dense<0.000000e+00> : vector<1x64xf32>
    %42 = tpu.matmul %12, %41, %cst_20 {dimension_numbers = #tpu.dot_dimension_numbers<[1], [1], [0], [0], [0, 0, 1, 0], [], []>} : vector<1x64xf32>, vector<64x64xf32>, vector<1x64xf32> -> vector<1x64xf32>
    "tpu.trace_stop"() : () -> ()
    %43 = vector.broadcast %13 : vector<1x1xf32> to vector<1x64xf32>
    %44 = arith.addf %42, %43 : vector<1x64xf32>
    %cst_21 = arith.constant dense<0xFF800000> : vector<1xf32>
    %45 = vector.multi_reduction <maximumf>, %44, %cst_21 [1] : vector<1x64xf32> to vector<1xf32>
    %46 = vector.shape_cast %45 : vector<1xf32> to vector<1x1xf32>
    %47 = vector.broadcast %46 : vector<1x1xf32> to vector<1x64xf32>
    %48 = arith.subf %44, %47 : vector<1x64xf32>
    %49 = math.exp %48 : vector<1x64xf32>
    %cst_22 = arith.constant dense<0.000000e+00> : vector<1xf32>
    %50 = vector.multi_reduction <add>, %49, %cst_22 [1] : vector<1x64xf32> to vector<1xf32>
    %51 = vector.shape_cast %50 : vector<1xf32> to vector<1x1xf32>
    %52 = tpu.reciprocal %51 {approx = true} : vector<1x1xf32> -> vector<1x1xf32>
    %53 = vector.broadcast %52 : vector<1x1xf32> to vector<1x64xf32>
    %54 = arith.mulf %49, %53 : vector<1x64xf32>
    %cst_23 = arith.constant dense<0.000000e+00> : vector<1x32xf32>
    %55 = tpu.matmul %54, %37, %cst_23 {dimension_numbers = #tpu.dot_dimension_numbers<[1], [0], [0], [1], [0, 0, 1, 1], [], []>} : vector<1x64xf32>, vector<64x32xf32>, vector<1x32xf32> -> vector<1x32xf32>
    %56 = vector.extract_strided_slice %1 {offsets = [1, 0], sizes = [1, 32], strides = [1, 1]} : vector<2x32xf32> to vector<1x32xf32>
    %57 = arith.addf %55, %56 : vector<1x32xf32>
    %58 = tpu.concatenate %35, %57 in 0 : vector<1x32xf32>, vector<1x32xf32> -> vector<2x32xf32>
    %c0_24 = arith.constant 0 : index
    %c0_25 = arith.constant 0 : index
    %59 = vector.load %arg8[%c0_24, %c0_25] : memref<2x32xf32, #tpu.memory_space<vmem>>, vector<2x32xf32>
    tpu.vector_store %arg8[%c0_24, %c0_25], %58 {strides = array<i32>} : memref<2x32xf32, #tpu.memory_space<vmem>>, vector<2x32xf32>,
    return
  }
}

</mosaic_0001>

<llo_original>
// kernel: tpu_custom_call.1
$region0: #{tpu_custom_call.1}
  #allocation0 [shape = 'u32[]', space=smem, size = 0x4, offset = 0x4, fixed_abs, tag = 'smem constant byte address 0x4 - core index']
  #allocation1 [shape = 'u32[72,128]{1,0:T(1,128)}', space=vmem, size = 0x9000, scoped, tag = 'internal scratch']
  #allocation2 [shape = 'f32[1,1]{1,0:T(1,128)S(1)}', space=vmem, size = 0x200, scoped, tag = 'scoped memory for tpu_custom_call.1']
  %s0 = inlined_call_operand.vmem [shape: f32[128,32], index: 0, kind: input, shape index: {}]
  %s1 = inlined_call_operand.vmem [shape: f32[2,32], index: 1, kind: input, shape index: {}]
  %s2 = inlined_call_operand.vmem [shape: f32[32,64], index: 2, kind: input, shape index: {}]
  %s3 = inlined_call_operand.vmem [shape: f32[1,64], index: 3, kind: input, shape index: {}]
  %s4 = inlined_call_operand.vmem [shape: f32[32,64], index: 4, kind: input, shape index: {}]
  %s5 = inlined_call_operand.vmem [shape: f32[1,64], index: 5, kind: input, shape index: {}]
  %s6 = inlined_call_operand.vmem [shape: f32[1,64], index: 6, kind: input, shape index: {}]
  %s7 = inlined_call_operand.<no memory space> [shape: f32[1,1], index: 7, kind: input, shape index: {}]
  %s8 = inlined_call_operand.hbm [shape: f32[2,32], index: 8, kind: output, shape index: {}]
  %s9 = sld [smem:[#allocation0]]
  $region42: #{tpu_custom_call.1} parent=0
    _
  %s11 = ssub.s32 1, %s9
  %s12 = scalar_select 0, %s11, %s9
  %v13 = vstv %s7
  %14 = vst [vmem:[#allocation2] sm:$0x1] %v13
  $region1: #{tpu_custom_call.1} parent=0
    #allocation3 [shape = 'u8[1024]{0}', space=vmem, size = 0x400, scoped, tag = 'output window, operand 0, single buffered']
    #allocation4 [shape = 's32[1]{0}', space=sflag, size = 0x4, scoped, tag = 'scoped memory for tpu_custom_call.1']
    %15 = vsyncpa [#allocation4], 0
    // Predicated region
    $region2: #{tpu_custom_call.1} parent=1 // pred_check
      _
    $region3: #{tpu_custom_call.1} parent=1 // pred_check_branch
      %17 = sbr.rel (0) target = $region5
    $region4: #{tpu_custom_call.1} parent=1 // pred_region
      _
    $region5: #{tpu_custom_call.1} parent=1 // pred_fallthru
      _
    // Predicated region
    $region6: #{tpu_custom_call.1} parent=1 // pred_check
      _
    $region7: #{tpu_custom_call.1} parent=1 // pred_check_branch
      %19 = sbr.rel (0) target = $region9
    $region8: #{tpu_custom_call.1} parent=1 // pred_region
      _
    $region9: #{tpu_custom_call.1} parent=1 // pred_fallthru
      _
    // Predicated region
    $region10: #{tpu_custom_call.1} parent=1 // pred_check
      _
    $region11: #{tpu_custom_call.1} parent=1 // pred_check_branch
      %21 = sbr.rel (0) target = $region13
    $region12: #{tpu_custom_call.1} parent=1 // pred_region
      _
    $region13: #{tpu_custom_call.1} parent=1 // pred_fallthru
      _
    // Predicated region
    $region14: #{tpu_custom_call.1} parent=1 // pred_check
      _
    $region15: #{tpu_custom_call.1} parent=1 // pred_check_branch
      %23 = sbr.rel (0) target = $region17
    $region16: #{tpu_custom_call.1} parent=1 // pred_region
      _
    $region17: #{tpu_custom_call.1} parent=1 // pred_fallthru
      _
    // Predicated region
    $region18: #{tpu_custom_call.1} parent=1 // pred_check
      _
    $region19: #{tpu_custom_call.1} parent=1 // pred_check_branch
      %25 = sbr.rel (0) target = $region21
    $region20: #{tpu_custom_call.1} parent=1 // pred_region
      _
    $region21: #{tpu_custom_call.1} parent=1 // pred_fallthru
      _
    // Predicated region
    $region22: #{tpu_custom_call.1} parent=1 // pred_check
      _
    $region23: #{tpu_custom_call.1} parent=1 // pred_check_branch
      %27 = sbr.rel (0) target = $region25
    $region24: #{tpu_custom_call.1} parent=1 // pred_region
      _
    $region25: #{tpu_custom_call.1} parent=1 // pred_fallthru
      _
    // Predicated region
    $region26: #{tpu_custom_call.1} parent=1 // pred_check
      _
    $region27: #{tpu_custom_call.1} parent=1 // pred_check_branch
      %29 = sbr.rel (0) target = $region29
    $region28: #{tpu_custom_call.1} parent=1 // pred_region
      _
    $region29: #{tpu_custom_call.1} parent=1 // pred_fallthru
      _
    // Predicated region
    $region30: #{tpu_custom_call.1} parent=1 // pred_check
      _
    $region31: #{tpu_custom_call.1} parent=1 // pred_check_branch
      %31 = sbr.rel (0) target = $region33
    $region32: #{tpu_custom_call.1} parent=1 // pred_region
      _
    $region33: #{tpu_custom_call.1} parent=1 // pred_fallthru
      _
    %v32 = vld [vmem:[%s0] sm:$0xff]
    %v33 = vld [vmem:[%s0 + $0x8] sm:$0xff]
    %v34 = vld [vmem:[%s0 + $0x10] sm:$0xff]
    %v35 = vld [vmem:[%s0 + $0x18] sm:$0xff]
    %v36 = vld [vmem:[%s0 + $0x20] sm:$0xff]
    %v37 = vld [vmem:[%s0 + $0x28] sm:$0xff]
    %v38 = vld [vmem:[%s0 + $0x30] sm:$0xff]
    %v39 = vld [vmem:[%s0 + $0x38] sm:$0xff]
    %v40 = vld [vmem:[%s0 + $0x40] sm:$0xff]
    %v41 = vld [vmem:[%s0 + $0x48] sm:$0xff]
    %v42 = vld [vmem:[%s0 + $0x50] sm:$0xff]
    %v43 = vld [vmem:[%s0 + $0x58] sm:$0xff]
    %v44 = vld [vmem:[%s0 + $0x60] sm:$0xff]
    %v45 = vld [vmem:[%s0 + $0x68] sm:$0xff]
    %v46 = vld [vmem:[%s0 + $0x70] sm:$0xff]
    %v47 = vld [vmem:[%s0 + $0x78] sm:$0xff]
    %v48 = vld [vmem:[%s1] sm:$0x3]
    %v49 = vld [vmem:[%s2] sm:$0xff]
    %v50 = vld [vmem:[%s2 + $0x8] sm:$0xff]
    %v51 = vld [vmem:[%s2 + $0x10] sm:$0xff]
    %v52 = vld [vmem:[%s2 + $0x18] sm:$0xff]
    %v53 = vld [vmem:[%s3] sm:$0x1]
    %v55 = vperm.slane %v53, 0
    %vm57 = vcmask 261120
    %v59 = vsel %vm57, %v32, 0
    %v62 = vsel %vm57, %v33, 0
    %v65 = vsel %vm57, %v34, 0
    %v68 = vsel %vm57, %v35, 0
    %v71 = vsel %vm57, %v36, 0
    %v74 = vsel %vm57, %v37, 0
    %v77 = vsel %vm57, %v38, 0
    %v80 = vsel %vm57, %v39, 0
    %v83 = vsel %vm57, %v40, 0
    %v86 = vsel %vm57, %v41, 0
    %v89 = vsel %vm57, %v42, 0
    %v92 = vsel %vm57, %v43, 0
    %v95 = vsel %vm57, %v44, 0
    %v98 = vsel %vm57, %v45, 0
    %v101 = vsel %vm57, %v46, 0
    %v104 = vsel %vm57, %v47, 0
    %106 = vmatpush.msra.mxu0 0.0
    %107 = vmatpush.msra.mxu0 0.0
    %108 = vmatpush.msra.mxu0 0.0
    %109 = vmatpush.msra.mxu0 0.0
    %110 = vmatpush.msra.mxu0 0.0
    %111 = vmatpush.msra.mxu0 0.0
    %112 = vmatpush.msra.mxu0 0.0
    %113 = vmatpush.msra.mxu0 0.0
    %114 = vmatpush.msra.mxu0 0.0
    %115 = vmatpush.msra.mxu0 0.0
    %116 = vmatpush.msra.mxu0 0.0
    %117 = vmatpush.msra.mxu0 0.0
    %118 = vmatpush.msra.mxu0 %v52
    %119 = vmatpush.msra.mxu0 %v51
    %120 = vmatpush.msra.mxu0 %v50
    %121 = vmatpush.msra.mxu0 %v49
    %122 = vmatmul.f32.gmra.mxu0 %v59
    %v123 = vpop.f32.mrf.mxu0
    %v124 = vadd.f32 %v55, %v123
    %125 = vmatmul.f32.gmra.mxu0 %v62
    %v126 = vpop.f32.mrf.mxu0
    %v127 = vadd.f32 %v55, %v126
    %128 = vmatmul.f32.gmra.mxu0 %v65
    %v129 = vpop.f32.mrf.mxu0
    %v130 = vadd.f32 %v55, %v129
    %131 = vmatmul.f32.gmra.mxu0 %v68
    %v132 = vpop.f32.mrf.mxu0
    %v133 = vadd.f32 %v55, %v132
    %134 = vmatmul.f32.gmra.mxu0 %v71
    %v135 = vpop.f32.mrf.mxu0
    %v136 = vadd.f32 %v55, %v135
    %137 = vmatmul.f32.gmra.mxu0 %v74
    %v138 = vpop.f32.mrf.mxu0
    %v139 = vadd.f32 %v55, %v138
    %140 = vmatmul.f32.gmra.mxu0 %v77
    %v141 = vpop.f32.mrf.mxu0
    %v142 = vadd.f32 %v55, %v141
    %143 = vmatmul.f32.gmra.mxu0 %v80
    %v144 = vpop.f32.mrf.mxu0
    %v145 = vadd.f32 %v55, %v144
    %146 = vmatmul.f32.gmra.mxu0 %v83
    %v147 = vpop.f32.mrf.mxu0
    %v148 = vadd.f32 %v55, %v147
    %149 = vmatmul.f32.gmra.mxu0 %v86
    %v150 = vpop.f32.mrf.mxu0
    %v151 = vadd.f32 %v55, %v150
    %152 = vmatmul.f32.gmra.mxu0 %v89
    %v153 = vpop.f32.mrf.mxu0
    %v154 = vadd.f32 %v55, %v153
    %155 = vmatmul.f32.gmra.mxu0 %v92
    %v156 = vpop.f32.mrf.mxu0
    %v157 = vadd.f32 %v55, %v156
    %158 = vmatmul.f32.gmra.mxu0 %v95
    %v159 = vpop.f32.mrf.mxu0
    %v160 = vadd.f32 %v55, %v159
    %161 = vmatmul.f32.gmra.mxu0 %v98
    %v162 = vpop.f32.mrf.mxu0
    %v163 = vadd.f32 %v55, %v162
    %164 = vmatmul.f32.gmra.mxu0 %v101
    %v165 = vpop.f32.mrf.mxu0
    %v166 = vadd.f32 %v55, %v165
    %167 = vmatmul.f32.gmra.mxu0 %v104
    %v168 = vpop.f32.mrf.mxu0
    %v169 = vadd.f32 %v55, %v168
    %170 = vdwg.mxu0
    %v171 = vld [vmem:[%s4] sm:$0xff]
    %v172 = vld [vmem:[%s4 + $0x8] sm:$0xff]
    %v173 = vld [vmem:[%s4 + $0x10] sm:$0xff]
    %v174 = vld [vmem:[%s4 + $0x18] sm:$0xff]
    %v175 = vld [vmem:[%s5] sm:$0x1]
    %v177 = vperm.slane %v175, 0
    %v180 = vsel %vm57, %v48, 0
    %182 = vmatpush.msra.mxu0 0.0
    %183 = vmatpush.msra.mxu0 0.0
    %184 = vmatpush.msra.mxu0 0.0
    %185 = vmatpush.msra.mxu0 0.0
    %186 = vmatpush.msra.mxu0 0.0
    %187 = vmatpush.msra.mxu0 0.0
    %188 = vmatpush.msra.mxu0 0.0
    %189 = vmatpush.msra.mxu0 0.0
    %190 = vmatpush.msra.mxu0 0.0
    %191 = vmatpush.msra.mxu0 0.0
    %192 = vmatpush.msra.mxu0 0.0
    %193 = vmatpush.msra.mxu0 0.0
    %194 = vmatpush.msra.mxu0 %v174
    %195 = vmatpush.msra.mxu0 %v173
    %196 = vmatpush.msra.mxu0 %v172
    %197 = vmatpush.msra.mxu0 %v171
    %198 = vmatmul.f32.gmra.mxu0 %v180
    %v199 = vpop.f32.mrf.mxu0
    %v200 = vadd.f32 %v177, %v199
    %201 = vdwg.mxu0
    %v202 = vld [vmem:[%s6] sm:$0x1]
    %v203 = vld [vmem:[#allocation2] sm:$0x1]
    %v204 = vperm.slane %v200, 0
    %v205 = vadd.f32 %v124, %v204
    %v206 = vadd.f32 %v127, %v204
    %v207 = vadd.f32 %v130, %v204
    %v208 = vadd.f32 %v133, %v204
    %v209 = vadd.f32 %v136, %v204
    %v210 = vadd.f32 %v139, %v204
    %v211 = vadd.f32 %v142, %v204
    %v212 = vadd.f32 %v145, %v204
    %v213 = vtanh.pop %v205
    %v214 = vtanh.pop %v206
    %v215 = vtanh.pop %v207
    %v216 = vtanh.pop %v208
    %v217 = vtanh.pop %v209
    %v218 = vtanh.pop %v210
    %v219 = vtanh.pop %v211
    %v220 = vtanh.pop %v212
    %222 = vset.pattern.permute.xlu0 0
    %223 = vperm.xlu0 %222, %v203
    %v224 = vpop.permute.xlu0 %223
    %v226 = vperm.slane %v224, 0
    %vm227 = vcmask 523264
    %v229 = vsel %vm227, %v202, 0
    %v232 = vsel %vm227, %v213, 0
    %v235 = vsel %vm227, %v214, 0
    %v238 = vsel %vm227, %v215, 0
    %v241 = vsel %vm227, %v216, 0
    %v244 = vsel %vm227, %v217, 0
    %v247 = vsel %vm227, %v218, 0
    %v250 = vsel %vm227, %v219, 0
    %v253 = vsel %vm227, %v220, 0
    %255 = vmatpush.xpose.msra.mxu0 0.0
    %256 = vmatpush.xpose.msra.mxu0 0.0
    %257 = vmatpush.xpose.msra.mxu0 0.0
    %258 = vmatpush.xpose.msra.mxu0 0.0
    %259 = vmatpush.xpose.msra.mxu0 0.0
    %260 = vmatpush.xpose.msra.mxu0 0.0
    %261 = vmatpush.xpose.msra.mxu0 0.0
    %262 = vmatpush.xpose.msra.mxu0 0.0
    %263 = vmatpush.xpose.msra.mxu0 %v253
    %264 = vmatpush.xpose.msra.mxu0 %v250
    %265 = vmatpush.xpose.msra.mxu0 %v247
    %266 = vmatpush.xpose.msra.mxu0 %v244
    %267 = vmatpush.xpose.msra.mxu0 %v241
    %268 = vmatpush.xpose.msra.mxu0 %v238
    %269 = vmatpush.xpose.msra.mxu0 %v235
    %270 = vmatpush.xpose.msra.mxu0 %v232
    %271 = vmatmul.f32.gmra.mxu0 %v229
    %v272 = vpop.f32.mrf.mxu0
    %v273 = vadd.f32 %v226, %v272
    %274 = vdwg.mxu0
    %vm275 = vcmask 516096
    %v276 = vsel %vm275, %v273, -inf
    %277 = vmax.xlane.f32.xlu0 %v276
    %v278 = vpop.xlane.xlu0 %277
    %v279 = vsub.f32 %v273, %v278
    %v280 = vmul.f32 %v279, 1.442695
    %v281 = vpow.pop %v280
    %v282 = vsel %vm275, %v281, 0.0
    %283 = vadd.xlane.f32.xlu0 %v282
    %v284 = vpop.xlane.xlu0 %283
    %v285 = vrcp.pop %v284
    %v286 = vmul.f32 %v281, %v285
    %v288 = vsel %vm227, %v286, 0
    %290 = vmatpush.msra.mxu0 0.0
    %291 = vmatpush.msra.mxu0 0.0
    %292 = vmatpush.msra.mxu0 0.0
    %293 = vmatpush.msra.mxu0 0.0
    %294 = vmatpush.msra.mxu0 0.0
    %295 = vmatpush.msra.mxu0 0.0
    %296 = vmatpush.msra.mxu0 0.0
    %297 = vmatpush.msra.mxu0 0.0
    %298 = vmatpush.msra.mxu0 %v39
    %299 = vmatpush.msra.mxu0 %v38
    %300 = vmatpush.msra.mxu0 %v37
    %301 = vmatpush.msra.mxu0 %v36
    %302 = vmatpush.msra.mxu0 %v35
    %303 = vmatpush.msra.mxu0 %v34
    %304 = vmatpush.msra.mxu0 %v33
    %305 = vmatpush.msra.mxu0 %v32
    %306 = vmatmul.f32.gmra.mxu0 %v288
    %v307 = vpop.f32.mrf.mxu0
    %v308 = vadd.f32 %v48, %v307
    %309 = vdwg.mxu0
    %v310 = vperm.slane %v200, 1
    %v311 = vadd.f32 %v148, %v310
    %v312 = vadd.f32 %v151, %v310
    %v313 = vadd.f32 %v154, %v310
    %v314 = vadd.f32 %v157, %v310
    %v315 = vadd.f32 %v160, %v310
    %v316 = vadd.f32 %v163, %v310
    %v317 = vadd.f32 %v166, %v310
    %v318 = vadd.f32 %v169, %v310
    %v319 = vtanh.pop %v311
    %v320 = vtanh.pop %v312
    %v321 = vtanh.pop %v313
    %v322 = vtanh.pop %v314
    %v323 = vtanh.pop %v315
    %v324 = vtanh.pop %v316
    %v325 = vtanh.pop %v317
    %v326 = vtanh.pop %v318
    %v328 = vsel %vm227, %v319, 0
    %v331 = vsel %vm227, %v320, 0
    %v334 = vsel %vm227, %v321, 0
    %v337 = vsel %vm227, %v322, 0
    %v340 = vsel %vm227, %v323, 0
    %v343 = vsel %vm227, %v324, 0
    %v346 = vsel %vm227, %v325, 0
    %v349 = vsel %vm227, %v326, 0
    %351 = vmatpush.xpose.msra.mxu0 0.0
    %352 = vmatpush.xpose.msra.mxu0 0.0
    %353 = vmatpush.xpose.msra.mxu0 0.0
    %354 = vmatpush.xpose.msra.mxu0 0.0
    %355 = vmatpush.xpose.msra.mxu0 0.0
    %356 = vmatpush.xpose.msra.mxu0 0.0
    %357 = vmatpush.xpose.msra.mxu0 0.0
    %358 = vmatpush.xpose.msra.mxu0 0.0
    %359 = vmatpush.xpose.msra.mxu0 %v349
    %360 = vmatpush.xpose.msra.mxu0 %v346
    %361 = vmatpush.xpose.msra.mxu0 %v343
    %362 = vmatpush.xpose.msra.mxu0 %v340
    %363 = vmatpush.xpose.msra.mxu0 %v337
    %364 = vmatpush.xpose.msra.mxu0 %v334
    %365 = vmatpush.xpose.msra.mxu0 %v331
    %366 = vmatpush.xpose.msra.mxu0 %v328
    %367 = vmatmul.f32.gmra.mxu0 %v229
    %v368 = vpop.f32.mrf.mxu0
    %v369 = vadd.f32 %v226, %v368
    %370 = vdwg.mxu0
    %v371 = vsel %vm275, %v369, -inf
    %372 = vmax.xlane.f32.xlu0 %v371
    %v373 = vpop.xlane.xlu0 %372
    %v374 = vsub.f32 %v369, %v373
    %v375 = vmul.f32 %v374, 1.442695
    %v376 = vpow.pop %v375
    %v377 = vsel %vm275, %v376, 0.0
    %378 = vadd.xlane.f32.xlu0 %v377
    %v379 = vpop.xlane.xlu0 %378
    %v380 = vrcp.pop %v379
    %v381 = vmul.f32 %v376, %v380
    %v382 = vrot.slane %v48, 1
    %v385 = vsel %vm227, %v381, 0
    %387 = vmatpush.msra.mxu0 0.0
    %388 = vmatpush.msra.mxu0 0.0
    %389 = vmatpush.msra.mxu0 0.0
    %390 = vmatpush.msra.mxu0 0.0
    %391 = vmatpush.msra.mxu0 0.0
    %392 = vmatpush.msra.mxu0 0.0
    %393 = vmatpush.msra.mxu0 0.0
    %394 = vmatpush.msra.mxu0 0.0
    %395 = vmatpush.msra.mxu0 %v47
    %396 = vmatpush.msra.mxu0 %v46
    %397 = vmatpush.msra.mxu0 %v45
    %398 = vmatpush.msra.mxu0 %v44
    %399 = vmatpush.msra.mxu0 %v43
    %400 = vmatpush.msra.mxu0 %v42
    %401 = vmatpush.msra.mxu0 %v41
    %402 = vmatpush.msra.mxu0 %v40
    %403 = vmatmul.f32.gmra.mxu0 %v385
    %v404 = vpop.f32.mrf.mxu0
    %v405 = vadd.f32 %v382, %v404
    %406 = vdwg.mxu0
    %v408 = vrot.slane %v405, 7
    %vm410 = vcmask 1040384
    %v411 = vsel %vm410, %v308, %v408
    %vm412 = vcmask 254976
    %413 = vst.msk [vmem:[#allocation3] sm:$0x3] %vm412, %v411
    // Predicated region
    $region34: #{tpu_custom_call.1} parent=1 // pred_check
      _
    $region35: #{tpu_custom_call.1} parent=1 // pred_check_branch
      %415 = sbr.rel (0) target = $region37
    $region36: #{tpu_custom_call.1} parent=1 // pred_region
      %417 = vsyncadd [#allocation4], 0
      %s419 = sshll.u32 [#allocation3], 4
      %s420 = int_to_ptr.vmem [resolvable:$true] %s419
      %s421 = sshll.u32 %s8, 4
      %s422 = int_to_ptr.hbm [resolvable:$true] %s421
      %424 = dma.vmem_to_hbm [thread:$0]  %s420, 32, %s422, [#allocation4]
    $region37: #{tpu_custom_call.1} parent=1 // pred_fallthru
      _
    // Predicated region
    $region38: #{tpu_custom_call.1} parent=1 // pred_check
      _
    $region39: #{tpu_custom_call.1} parent=1 // pred_check_branch
      %426 = sbr.rel (0) target = $region41
    $region40: #{tpu_custom_call.1} parent=1 // pred_region
      %428 = dma.done [#allocation4], 32
    $region41: #{tpu_custom_call.1} parent=1 // pred_fallthru
      _
    %429 = vsyncpa [#allocation4], 1

</llo_original>
